<compile_context>
chip_gen: v6e
topology: v6e:2x2x1
jax: 0.10.0
libtpu: 0.0.40
codegen_flags: <defaults>
</compile_context>

<pallas_src>
import functools

import jax
import jax.numpy as jnp
from jax import lax
from jax.experimental import pallas as pl
from jax.experimental.pallas import tpu as pltpu


def _round_up(x, m):
    return (x + m - 1) // m * m


def _conv1d_kernel(x_ref, w_ref, b_ref, o_ref, *, K, stride, dilation, tile_t):
    # x_ref: (1, T_x, Cin)      padded time axis for this batch, resident across tiles
    # w_ref: (K, Cin, Cout_p)   resident across the whole grid
    # b_ref: (1, Cout_p)        f32 bias, resident
    # o_ref: (1, tile_t, Cout_p)
    i = pl.program_id(1)
    # First input row feeding this output tile; tile_t is a multiple of 8.
    t0 = pl.multiple_of(i * (tile_t * stride), 8)

    acc = None
    for k in range(K):  # K is small & static -> unrolled
        start = t0 + k * dilation
        if stride == 1:
            xw = x_ref[0, pl.ds(start, tile_t), :]
        else:
            xw = x_ref[0, pl.ds(start, tile_t, stride=stride), :]
        part = jnp.dot(xw, w_ref[k], preferred_element_type=jnp.float32)
        acc = part if acc is None else acc + part

    o_ref[0] = (acc + b_ref[...]).astype(o_ref.dtype)


def conv_forward(x, weight, bias=None, *, stride=1, padding=0, dilation=1,
                 compute_dtype=jnp.bfloat16, tile_t_max=512):
    """Equivalent of Conv.forward.

    x:      (B, T, C_in)
    weight: (C_out, C_in, K)   (PyTorch Conv1d weight layout)
    bias:   (C_out,) or None
    returns (B, T_out, C_out)
    """
    B, T, Cin = x.shape
    Cout, Cin_w, K = weight.shape
    assert Cin_w == Cin

    T_out = (T + 2 * padding - dilation * (K - 1) - 1) // stride + 1
    assert T_out > 0

    Cout_p = _round_up(Cout, 128)                 # lane-dense output stores
    tile_t = min(_round_up(T_out, 8), _round_up(tile_t_max, 8))
    num_t = pl.cdiv(T_out, tile_t)
    T_out_al = num_t * tile_t                     # over-allocated output rows

    # Input rows needed to compute T_out_al output rows (extra rows read zeros).
    T_x = (T_out_al - 1) * stride + dilation * (K - 1) + 1
    T_x = _round_up(max(T_x, T + 2 * padding), 8)

    x_p = jnp.pad(x, ((0, 0), (padding, T_x - T - padding), (0, 0)))
    x_p = x_p.astype(compute_dtype)

    # (Cout, Cin, K) -> (K, Cin, Cout_p), zero-padded on output channels.
    w = jnp.transpose(weight, (2, 1, 0))
    w = jnp.pad(w, ((0, 0), (0, 0), (0, Cout_p - Cout))).astype(compute_dtype)

    b_vec = jnp.zeros((Cout,), jnp.float32) if bias is None else bias.astype(jnp.float32)
    b_mat = jnp.pad(b_vec, (0, Cout_p - Cout)).reshape(1, Cout_p)

    out_dtype = x.dtype
    itemsize = jnp.dtype(compute_dtype).itemsize
    flops = 2 * B * T_out_al * K * Cin * Cout_p
    bytes_accessed = (B * T_x * Cin * itemsize
                      + K * Cin * Cout_p * itemsize
                      + Cout_p * 4
                      + B * T_out_al * Cout_p * jnp.dtype(out_dtype).itemsize)

    kernel = functools.partial(_conv1d_kernel, K=K, stride=stride,
                               dilation=dilation, tile_t=tile_t)

    out = pl.pallas_call(
        kernel,
        out_shape=jax.ShapeDtypeStruct((B, T_out_al, Cout_p), out_dtype),
        grid=(B, num_t),
        in_specs=[
            # x: full padded time axis per batch; same block across the tile axis
            # -> DMA'd once per batch, stays resident in VMEM.
            pl.BlockSpec((1, T_x, Cin), lambda b, i: (b, 0, 0)),
            # weight / bias: resident across the whole grid.
            pl.BlockSpec((K, Cin, Cout_p), lambda b, i: (0, 0, 0)),
            pl.BlockSpec((1, Cout_p), lambda b, i: (0, 0)),
        ],
        out_specs=pl.BlockSpec((1, tile_t, Cout_p), lambda b, i: (b, i, 0)),
        compiler_params=pltpu.CompilerParams(
            dimension_semantics=("parallel", "parallel"),
        ),
        cost_estimate=pl.CostEstimate(flops=flops, transcendentals=0,
                                      bytes_accessed=bytes_accessed),
    )(x_p, w, b_mat)

    return out[:, :T_out, :Cout]


if __name__ == "__main__":
    # Module config (synthetic, deterministic): Conv(in_channels=8, out_channels=16,
    # kernel_size=3, stride=1, padding=1, dilation=1, bias=True)
    B, T, Cin, Cout, K = 2, 16, 8, 16, 3
    stride, padding, dilation = 1, 1, 1

    key = jax.random.PRNGKey(0)
    kx, kw, kb = jax.random.split(key, 3)

    x = jax.random.normal(kx, (B, T, Cin), dtype=jnp.float32)
    fan_in, fan_out = Cin * K, Cout * K
    limit = (6.0 / (fan_in + fan_out)) ** 0.5
    weight = jax.random.uniform(kw, (Cout, Cin, K), minval=-limit, maxval=limit,
                                dtype=jnp.float32)
    bias = jax.random.uniform(kb, (Cout,), minval=-0.1, maxval=0.1,
                              dtype=jnp.float32)

    def lax_ref(xr, wr, br):
        y = lax.conv_general_dilated(
            jnp.transpose(xr, (0, 2, 1)),          # (B, Cin, T)
            wr,                                    # (Cout, Cin, K)
            window_strides=(stride,),
            padding=[(padding, padding)],
            rhs_dilation=(dilation,),
            dimension_numbers=("NCH", "OIH", "NCH"),
            precision=lax.Precision.HIGHEST,
        ) + br[None, :, None]
        return jnp.transpose(y, (0, 2, 1))         # (B, T_out, Cout)

    # f32 compute path: structural / indexing check.
    out_f32 = jax.block_until_ready(
        conv_forward(x, weight, bias, stride=stride, padding=padding,
                     dilation=dilation, compute_dtype=jnp.float32))
    ref_f32 = lax_ref(x, weight, bias)
    assert out_f32.shape == ref_f32.shape
    assert jnp.allclose(out_f32, ref_f32, atol=2e-2, rtol=2e-2)

    # bf16 MXU path (default): compare against a reference with bf16-rounded inputs.
    out_bf16 = jax.block_until_ready(
        conv_forward(x, weight, bias, stride=stride, padding=padding,
                     dilation=dilation, compute_dtype=jnp.bfloat16))
    ref_bf16 = lax_ref(x.astype(jnp.bfloat16).astype(jnp.float32),
                       weight.astype(jnp.bfloat16).astype(jnp.float32), bias)
    assert out_bf16.shape == ref_bf16.shape
    assert jnp.allclose(out_bf16, ref_bf16, atol=1e-2, rtol=1e-2)

    print("KERNEL_OK")
</pallas_src>

<mosaic_0001>
module attributes {stable_mosaic.version = 11 : i64} {
  func.func @_conv1d_kernel(%arg0: i32, %arg1: i32, %arg2: memref<1x24x8xf32, #tpu.memory_space<vmem>>, %arg3: memref<3x8x128xf32, #tpu.memory_space<vmem>>, %arg4: memref<1x128xf32, #tpu.memory_space<vmem>>, %arg5: memref<1x16x128xf32, #tpu.memory_space<vmem>>) attributes {dimension_semantics = [#tpu.dimension_semantics<parallel>, #tpu.dimension_semantics<parallel>], iteration_bounds = array<i64: 2, 1>, scalar_prefetch = 0 : i64, scratch_operands = 0 : i64, tpu.core_type = #tpu.core_type<tc>, window_params = [{transform_indices = @transform_0, window_bounds = array<i64: 1, 24, 8>}, {pipeline_mode = #tpu.pipeline_mode<synchronous>, transform_indices = @transform_1, window_bounds = array<i64: 3, 8, 128>}, {pipeline_mode = #tpu.pipeline_mode<synchronous>, transform_indices = @transform_2, window_bounds = array<i64: 1, 128>}, {transform_indices = @transform_3, window_bounds = array<i64: 1, 16, 128>}]} {
    %c16_i32 = arith.constant 16 : i32
    %0 = arith.muli %arg1, %c16_i32 : i32
    %1 = tpu.assume_multiple %0, 8 : i32
    %c0_i32 = arith.constant 0 : i32
    %2 = arith.addi %1, %c0_i32 : i32
    %c0 = arith.constant 0 : index
    %3 = arith.index_cast %2 : i32 to index
    %c0_0 = arith.constant 0 : index
    %4 = vector.load %arg2[%c0, %3, %c0_0] : memref<1x24x8xf32, #tpu.memory_space<vmem>>, vector<1x16x8xf32>
    %5 = vector.shape_cast %4 : vector<1x16x8xf32> to vector<16x8xf32>
    %c0_1 = arith.constant 0 : index
    %c0_2 = arith.constant 0 : index
    %c0_3 = arith.constant 0 : index
    %6 = vector.load %arg3[%c0_1, %c0_2, %c0_3] : memref<3x8x128xf32, #tpu.memory_space<vmem>>, vector<1x8x128xf32>
    %7 = vector.shape_cast %6 : vector<1x8x128xf32> to vector<8x128xf32>
    %cst = arith.constant dense<0.000000e+00> : vector<16x128xf32>
    %8 = tpu.matmul %5, %7, %cst {dimension_numbers = #tpu.dot_dimension_numbers<[1], [0], [0], [1], [0, 0, 1, 1], [], []>} : vector<16x8xf32>, vector<8x128xf32>, vector<16x128xf32> -> vector<16x128xf32>
    %c1_i32 = arith.constant 1 : i32
    %9 = arith.addi %1, %c1_i32 : i32
    %c0_4 = arith.constant 0 : index
    %10 = arith.index_cast %9 : i32 to index
    %c0_5 = arith.constant 0 : index
    %11 = vector.load %arg2[%c0_4, %10, %c0_5] : memref<1x24x8xf32, #tpu.memory_space<vmem>>, vector<1x16x8xf32>
    %12 = vector.shape_cast %11 : vector<1x16x8xf32> to vector<16x8xf32>
    %c1 = arith.constant 1 : index
    %c0_6 = arith.constant 0 : index
    %c0_7 = arith.constant 0 : index
    %13 = vector.load %arg3[%c1, %c0_6, %c0_7] : memref<3x8x128xf32, #tpu.memory_space<vmem>>, vector<1x8x128xf32>
    %14 = vector.shape_cast %13 : vector<1x8x128xf32> to vector<8x128xf32>
    %cst_8 = arith.constant dense<0.000000e+00> : vector<16x128xf32>
    %15 = tpu.matmul %12, %14, %cst_8 {dimension_numbers = #tpu.dot_dimension_numbers<[1], [0], [0], [1], [0, 0, 1, 1], [], []>} : vector<16x8xf32>, vector<8x128xf32>, vector<16x128xf32> -> vector<16x128xf32>
    %16 = arith.addf %8, %15 : vector<16x128xf32>
    %c2_i32 = arith.constant 2 : i32
    %17 = arith.addi %1, %c2_i32 : i32
    %c0_9 = arith.constant 0 : index
    %18 = arith.index_cast %17 : i32 to index
    %c0_10 = arith.constant 0 : index
    %19 = vector.load %arg2[%c0_9, %18, %c0_10] : memref<1x24x8xf32, #tpu.memory_space<vmem>>, vector<1x16x8xf32>
    %20 = vector.shape_cast %19 : vector<1x16x8xf32> to vector<16x8xf32>
    %c2 = arith.constant 2 : index
    %c0_11 = arith.constant 0 : index
    %c0_12 = arith.constant 0 : index
    %21 = vector.load %arg3[%c2, %c0_11, %c0_12] : memref<3x8x128xf32, #tpu.memory_space<vmem>>, vector<1x8x128xf32>
    %22 = vector.shape_cast %21 : vector<1x8x128xf32> to vector<8x128xf32>
    %cst_13 = arith.constant dense<0.000000e+00> : vector<16x128xf32>
    %23 = tpu.matmul %20, %22, %cst_13 {dimension_numbers = #tpu.dot_dimension_numbers<[1], [0], [0], [1], [0, 0, 1, 1], [], []>} : vector<16x8xf32>, vector<8x128xf32>, vector<16x128xf32> -> vector<16x128xf32>
    %24 = arith.addf %16, %23 : vector<16x128xf32>
    %c0_14 = arith.constant 0 : index
    %c0_15 = arith.constant 0 : index
    %25 = vector.load %arg4[%c0_14, %c0_15] : memref<1x128xf32, #tpu.memory_space<vmem>>, vector<1x128xf32>
    %26 = vector.broadcast %25 : vector<1x128xf32> to vector<16x128xf32>
    %27 = arith.addf %24, %26 : vector<16x128xf32>
    %c0_16 = arith.constant 0 : index
    %c0_17 = arith.constant 0 : index
    %c0_18 = arith.constant 0 : index
    %28 = vector.load %arg5[%c0_16, %c0_17, %c0_18] : memref<1x16x128xf32, #tpu.memory_space<vmem>>, vector<1x16x128xf32>
    %29 = vector.shape_cast %28 : vector<1x16x128xf32> to vector<16x128xf32>
    %30 = vector.shape_cast %27 : vector<16x128xf32> to vector<1x16x128xf32>
    tpu.vector_store %arg5[%c0_16, %c0_17, %c0_18], %30 {strides = array<i32>} : memref<1x16x128xf32, #tpu.memory_space<vmem>>, vector<1x16x128xf32>,
    return
  }
  func.func @transform_0(%arg0: i32, %arg1: i32) -> (i32, i32, i32) {
    %c0_i32 = arith.constant 0 : i32
    %c0_i32_0 = arith.constant 0 : i32
    %c0_i32_1 = arith.constant 0 : i32
    return %arg0, %c0_i32, %c0_i32_0 : i32, i32, i32
  }
  func.func @transform_1(%arg0: i32, %arg1: i32) -> (i32, i32, i32) {
    %c0_i32 = arith.constant 0 : i32
    %c0_i32_0 = arith.constant 0 : i32
    %c0_i32_1 = arith.constant 0 : i32
    %c0_i32_2 = arith.constant 0 : i32
    return %c0_i32, %c0_i32_0, %c0_i32_1 : i32, i32, i32
  }
  func.func @transform_2(%arg0: i32, %arg1: i32) -> (i32, i32) {
    %c0_i32 = arith.constant 0 : i32
    %c0_i32_0 = arith.constant 0 : i32
    %c0_i32_1 = arith.constant 0 : i32
    return %c0_i32, %c0_i32_0 : i32, i32
  }
  func.func @transform_3(%arg0: i32, %arg1: i32) -> (i32, i32, i32) {
    %c0_i32 = arith.constant 0 : i32
    %c0_i32_0 = arith.constant 0 : i32
    return %arg0, %arg1, %c0_i32 : i32, i32, i32
  }
}

</mosaic_0001>

<llo_original>
// kernel: tpu_custom_call.1
$region0: #{tpu_custom_call.1}
  #allocation0 [shape = 'u32[]', space=smem, size = 0x4, offset = 0x4, fixed_abs, tag = 'smem constant byte address 0x4 - core index']
  #allocation1 [shape = 'u32[144,128]{1,0:T(1,128)}', space=vmem, size = 0x12000, scoped, tag = 'internal scratch']
  %s0 = inlined_call_operand.vmem [shape: f32[2,24,8], index: 0, kind: input, shape index: {}]
  %s1 = inlined_call_operand.vmem [shape: f32[3,8,128], index: 1, kind: input, shape index: {}]
  %s2 = inlined_call_operand.vmem [shape: f32[1,128], index: 2, kind: input, shape index: {}]
  %s3 = inlined_call_operand.hbm [shape: f32[2,16,128], index: 3, kind: output, shape index: {}]
  %s4 = sld [smem:[#allocation0]]
  $region45: #{tpu_custom_call.1} parent=0
    _
  %s6 = ssub.s32 1, %s4
  %s7 = scalar_select 0, %s6, %s4
  $region1: #{tpu_custom_call.1} parent=0
    #allocation2 [shape = 'u8[16384]{0}', space=vmem, size = 0x4000, scoped, tag = 'output window, operand 0']
    #allocation3 [shape = 's32[2]{0}', space=sflag, size = 0x8, scoped, tag = 'scoped memory for tpu_custom_call.1']
    %8 = vsyncpa [#allocation3], 0
    %s9 = scalar_lea.sflag [#allocation3], 1
    %10 = vsyncpa %s9, 0
    loop: start=0, step=1, limit=4
    $region2: #{tpu_custom_call.1} parent=1 // loop_pre_header
      _
    $region3: #{tpu_custom_call.1} parent=1 // loop_header
      %s12 = sphi 0, %s16
      %p13 = scmp.ge.s32.totalorder %s12, 4
      %s19 = sphi 0, %s31
      %s20 = sphi 0, %s27
      %s21 = sphi 0, %s19
      %s22 = sphi 0, %s20
      %s23 = sphi 0, %s21
      %s24 = sphi 0, %s22
      %s34 = sphi 0, %s36
      %s37 = sphi 0, %s34
      %s38 = sphi 0, %s37
      %s54 = sphi 0, %s38
      %s58 = sphi 0, %s58
      %s60 = sphi 0, %s58
      %s61 = sphi 0, %s60
      %s75 = sphi 0, %s61
      %s79 = sphi 0, %s79
      %s81 = sphi 0, %s79
      %s82 = sphi 0, %s81
      %s96 = sphi 0, %s82
      %s104 = sphi 0, %s106
      %s107 = sphi 0, %s104
      %s108 = sphi 0, %s107
      %s124 = sphi 0, %s108
    $region4: #{tpu_custom_call.1} parent=1 // loop_header_branch
      %15 = sbr.rel (%p13) target = $region8
    $region5: #{tpu_custom_call.1} parent=1 // loop_body
      %s17 = ssub.s32 %s12, 1
      %s18 = ssub.s32 %s12, 2
      %s25 = sadd.s32 1, %s20
      %p26 = scmp.ge.s32.totalorder %s25, 1
      %s27 = scalar_select %p26, 0, %s25
      %s28 = sadd.s32 1, %s19
      %s29 = scalar_select %p26, %s28, %s19
      %p30 = scmp.ge.s32.totalorder %s29, 2
      %s31 = scalar_select %p30, 0, %s29
      %s32 = ssub.s32 %s19, %s31
      %p33 = scmp.eq.s32.totalorder %s32, 0
      %s35 = sadd.s32 %s34, 1
      %s36 = scalar_select %p33, %s34, %s35
      %p39 = pneg %p33
      %p40 = scmp.eq.s32.totalorder %s12, 1
      %p41 = por %p39, %p40
      %p42 = scmp.ne.s32.totalorder %s34, %s37
      %p43 = scmp.eq.s32.totalorder %s12, 0
      %p44 = por %p42, %p43
      %p45 = scmp.ne.s32.totalorder %s34, %s37
      %p46 = scmp.eq.s32.totalorder %s17, 1
      %p47 = por %p45, %p46
      %p48 = scmp.ne.s32.totalorder %s37, %s38
      %p49 = scmp.eq.s32.totalorder %s17, 0
      %p50 = por %p48, %p49
      %p51 = scmp.ne.s32.totalorder %s37, %s38
      %p52 = scmp.eq.s32.totalorder %s18, 1
      %p53 = por %p51, %p52
      %p55 = scmp.ne.s32.totalorder %s38, %s54
      %p56 = scmp.eq.s32.totalorder %s18, 0
      %p57 = por %p55, %p56
      %s59 = sadd.s32 %s58, 1
      %p62 = scmp.eq.s32.totalorder %s12, 1
      %p63 = scmp.ne.s32.totalorder %s58, %s60
      %p64 = scmp.eq.s32.totalorder %s12, 0
      %p65 = por %p63, %p64
      %p66 = scmp.ne.s32.totalorder %s58, %s60
      %p67 = scmp.eq.s32.totalorder %s17, 1
      %p68 = por %p66, %p67
      %p69 = scmp.ne.s32.totalorder %s60, %s61
      %p70 = scmp.eq.s32.totalorder %s17, 0
      %p71 = por %p69, %p70
      %p72 = scmp.ne.s32.totalorder %s60, %s61
      %p73 = scmp.eq.s32.totalorder %s18, 1
      %p74 = por %p72, %p73
      %p76 = scmp.ne.s32.totalorder %s61, %s75
      %p77 = scmp.eq.s32.totalorder %s18, 0
      %p78 = por %p76, %p77
      %s80 = sadd.s32 %s79, 1
      %p83 = scmp.eq.s32.totalorder %s12, 1
      %p84 = scmp.ne.s32.totalorder %s79, %s81
      %p85 = scmp.eq.s32.totalorder %s12, 0
      %p86 = por %p84, %p85
      %p87 = scmp.ne.s32.totalorder %s79, %s81
      %p88 = scmp.eq.s32.totalorder %s17, 1
      %p89 = por %p87, %p88
      %p90 = scmp.ne.s32.totalorder %s81, %s82
      %p91 = scmp.eq.s32.totalorder %s17, 0
      %p92 = por %p90, %p91
      %p93 = scmp.ne.s32.totalorder %s81, %s82
      %p94 = scmp.eq.s32.totalorder %s18, 1
      %p95 = por %p93, %p94
      %p97 = scmp.ne.s32.totalorder %s82, %s96
      %p98 = scmp.eq.s32.totalorder %s18, 0
      %p99 = por %p97, %p98
      %s100 = ssub.s32 %s19, %s31
      %s101 = ssub.s32 %s20, %s27
      %s102 = sor.u32 %s100, %s101
      %p103 = scmp.eq.s32.totalorder %s102, 0
      %s105 = sadd.s32 %s104, 1
      %s106 = scalar_select %p103, %s104, %s105
      %p109 = pneg %p103
      %p110 = scmp.eq.s32.totalorder %s12, 1
      %p111 = por %p109, %p110
      %p112 = scmp.ne.s32.totalorder %s104, %s107
      %p113 = scmp.eq.s32.totalorder %s12, 0
      %p114 = por %p112, %p113
      %p115 = scmp.ne.s32.totalorder %s104, %s107
      %p116 = scmp.eq.s32.totalorder %s17, 1
      %p117 = por %p115, %p116
      %p118 = scmp.ne.s32.totalorder %s107, %s108
      %p119 = scmp.eq.s32.totalorder %s17, 0
      %p120 = por %p118, %p119
      %p121 = scmp.ne.s32.totalorder %s107, %s108
      %p122 = scmp.eq.s32.totalorder %s18, 1
      %p123 = por %p121, %p122
      %p125 = scmp.ne.s32.totalorder %s108, %s124
      %p126 = scmp.eq.s32.totalorder %s18, 0
      %p127 = por %p125, %p126
      %p128 = scmp.le.s32.totalorder 1, %s12
      %p129 = scmp.lt.s32.totalorder %s12, 3
      %p130 = pnand %p128, %p129
      %p131 = pneg %p130
      // Predicated region
      $region9: #{tpu_custom_call.1} parent=5 // pred_check
        _
      $region10: #{tpu_custom_call.1} parent=5 // pred_check_branch
        %133 = sbr.rel (%p130) target = $region12
      $region11: #{tpu_custom_call.1} parent=5 // pred_region
        %s134 = ssub.s32 %s12, 1
        // Predicated region
        $region13: #{tpu_custom_call.1} parent=11 // pred_check
          %p135 = pneg %p71
        $region14: #{tpu_custom_call.1} parent=11 // pred_check_branch
          %137 = sbr.rel (%p135) target = $region16
        $region15: #{tpu_custom_call.1} parent=11 // pred_region
          _
        $region16: #{tpu_custom_call.1} parent=11 // pred_fallthru
          _
        // Predicated region
        $region17: #{tpu_custom_call.1} parent=11 // pred_check
          %p138 = pneg %p92
        $region18: #{tpu_custom_call.1} parent=11 // pred_check_branch
          %140 = sbr.rel (%p138) target = $region20
        $region19: #{tpu_custom_call.1} parent=11 // pred_region
          _
        $region20: #{tpu_custom_call.1} parent=11 // pred_fallthru
          _
      $region12: #{tpu_custom_call.1} parent=5 // pred_fallthru
        _
      %p141 = scmp.lt.s32.totalorder %s12, 2
      // Predicated region
      $region21: #{tpu_custom_call.1} parent=5 // pred_check
        %p142 = pneg %p141
      $region22: #{tpu_custom_call.1} parent=5 // pred_check_branch
        %144 = sbr.rel (%p142) target = $region24
      $region23: #{tpu_custom_call.1} parent=5 // pred_region
        // Predicated region
        $region25: #{tpu_custom_call.1} parent=23 // pred_check
          %p145 = pneg %p44
        $region26: #{tpu_custom_call.1} parent=23 // pred_check_branch
          %147 = sbr.rel (%p145) target = $region28
        $region27: #{tpu_custom_call.1} parent=23 // pred_region
          %p148 = scmp.lt.s32.totalorder %s19, 1
          %s149 = scalar_select %p148, %s19, 1
          %s150 = smul.addr %s149, 3
          %s151 = smul.addr %s150, 8
          %s152 = scalar_lea.vmem %s0, %s151
        $region28: #{tpu_custom_call.1} parent=23 // pred_fallthru
          _
      $region24: #{tpu_custom_call.1} parent=5 // pred_fallthru
        _
      %p153 = scmp.le.s32.totalorder 1, %s12
      %p154 = scmp.lt.s32.totalorder %s12, 3
      %p155 = pnand %p153, %p154
      %p156 = pneg %p155
      // Predicated region
      $region29: #{tpu_custom_call.1} parent=5 // pred_check
        _
      $region30: #{tpu_custom_call.1} parent=5 // pred_check_branch
        %158 = sbr.rel (%p155) target = $region32
      $region31: #{tpu_custom_call.1} parent=5 // pred_region
        %s159 = ssub.s32 %s12, 1
        %p160 = scmp.lt.s32.totalorder %s21, 1
        %s161 = scalar_select %p160, %s21, 1
        %s162 = smul.addr %s161, 3
        %s163 = smul.addr %s162, 8
        %s164 = scalar_lea.vmem %s0, %s163
        %p165 = pneg %p50
        %p166 = pneg %p47
        %p167 = pneg %p71
        %p168 = pneg %p68
        %p169 = pneg %p92
        %p170 = pneg %p89
        %p171 = pneg %p120
        %p172 = pneg %p117
        %s173 = sand.u32 %s107, 1
        %s174 = scalar_lea.sflag [#allocation3], %s173
        %s175 = sand.u32 %s107, 1
        %s176 = smul.addr %s175, 16
        %s177 = scalar_lea.vmem [#allocation2], %s176
        %p178 = scmp.lt.s32.totalorder %s21, 1
        %s179 = scalar_select %p178, %s21, 1
        %s180 = smul.addr %s179, 3
        %s181 = smul.addr %s180, 8
        %s182 = scalar_lea.vmem %s0, %s181
        %s183 = smul.u32 2, %s22
        %s184 = smul.u32 %s22, 16
        %s185 = scalar_lea.vmem %s182, %s184
        %v186 = vld [vmem:[%s185] sm:$0xff]
        %v187 = vld [vmem:[%s185 + $0x8] sm:$0xff]
        %v188 = vld [vmem:[%s1] sm:$0xff]
        %s189 = sadd.s32 %s184, 1
        %s190 = scalar_lea.vmem %s182, %s189
        %v191 = vld [vmem:[%s190] sm:$0xff]
        %v192 = vld [vmem:[%s190 + $0x8] sm:$0xff]
        %s193 = scalar_lea.vmem %s1, 8
        %v194 = vld [vmem:[%s193] sm:$0xff]
        %vm195 = vcmask 64512
        %v197 = vsel %vm195, %v191, 0
        %v200 = vsel %vm195, %v192, 0
        %202 = vmatprep.subr.mxu0 0.0
        %203 = vmatpush1.msra.mxu0 0.0
        %204 = vmatprep.subr.mxu0 0.0
        %205 = vmatpush1.msra.mxu0 0.0
        %206 = vmatprep.subr.mxu0 0.0
        %207 = vmatpush1.msra.mxu0 0.0
        %208 = vmatprep.subr.mxu0 0.0
        %209 = vmatpush1.msra.mxu0 0.0
        %210 = vmatprep.subr.mxu0 0.0
        %211 = vmatpush1.msra.mxu0 0.0
        %212 = vmatprep.subr.mxu0 0.0
        %213 = vmatpush1.msra.mxu0 0.0
        %214 = vmatprep.subr.mxu0 0.0
        %215 = vmatpush1.msra.mxu0 0.0
        %216 = vmatprep.subr.mxu0 0.0
        %217 = vmatpush1.msra.mxu0 0.0
        %218 = vmatprep.subr.mxu0 0.0
        %219 = vmatpush1.msra.mxu0 0.0
        %220 = vmatprep.subr.mxu0 0.0
        %221 = vmatpush1.msra.mxu0 0.0
        %222 = vmatprep.subr.mxu0 0.0
        %223 = vmatpush1.msra.mxu0 0.0
        %224 = vmatprep.subr.mxu0 0.0
        %225 = vmatpush1.msra.mxu0 0.0
        %226 = vmatprep.subr.mxu0 0.0
        %227 = vmatpush1.msra.mxu0 0.0
        %228 = vmatprep.subr.mxu0 0.0
        %229 = vmatpush1.msra.mxu0 0.0
        %230 = vmatprep.subr.mxu0 0.0
        %231 = vmatpush1.msra.mxu0 0.0
        %232 = vmatprep.subr.mxu0 0.0
        %233 = vmatpush1.msra.mxu0 %v194
        %234 = vmatprep.subr.mxu0 0.0
        %235 = vmatpush2.msra.mxu0 0.0
        %236 = vmatprep.subr.mxu0 0.0
        %237 = vmatpush2.msra.mxu0 0.0
        %238 = vmatprep.subr.mxu0 0.0
        %239 = vmatpush2.msra.mxu0 0.0
        %240 = vmatprep.subr.mxu0 0.0
        %241 = vmatpush2.msra.mxu0 0.0
        %242 = vmatprep.subr.mxu0 0.0
        %243 = vmatpush2.msra.mxu0 0.0
        %244 = vmatprep.subr.mxu0 0.0
        %245 = vmatpush2.msra.mxu0 0.0
        %246 = vmatprep.subr.mxu0 0.0
        %247 = vmatpush2.msra.mxu0 0.0
        %248 = vmatprep.subr.mxu0 0.0
        %249 = vmatpush2.msra.mxu0 0.0
        %250 = vmatprep.subr.mxu0 0.0
        %251 = vmatpush2.msra.mxu0 0.0
        %252 = vmatprep.subr.mxu0 0.0
        %253 = vmatpush2.msra.mxu0 0.0
        %254 = vmatprep.subr.mxu0 0.0
        %255 = vmatpush2.msra.mxu0 0.0
        %256 = vmatprep.subr.mxu0 0.0
        %257 = vmatpush2.msra.mxu0 0.0
        %258 = vmatprep.subr.mxu0 0.0
        %259 = vmatpush2.msra.mxu0 0.0
        %260 = vmatprep.subr.mxu0 0.0
        %261 = vmatpush2.msra.mxu0 0.0
        %262 = vmatprep.subr.mxu0 0.0
        %263 = vmatpush2.msra.mxu0 0.0
        %264 = vmatprep.subr.mxu0 0.0
        %265 = vmatpush2.msra.mxu0 0.0
        %266 = vmatprep.mubr.f32.mxu0 0.0
        %267 = vmatmul.mubr.f32.gmra.mxu0 %v197
        %v268 = vpop.f32.mrf.mxu0
        %v269 = vadd.f32 0.0, %v268
        %v270 = vpop.f32.mrf.mxu0
        %271 = vmatprep.mubr.f32.mxu0 0.0
        %272 = vmatmul.mubr.f32.gmra.mxu0 %v200
        %v273 = vpop.f32.mrf.mxu0
        %v274 = vadd.f32 0.0, %v273
        %v275 = vpop.f32.mrf.mxu0
        %276 = vdwg.mxu0
        %v278 = vsel %vm195, %v186, 0
        %v281 = vsel %vm195, %v187, 0
        %283 = vmatprep.subr.mxu0 0.0
        %284 = vmatpush1.msra.mxu0 0.0
        %285 = vmatprep.subr.mxu0 0.0
        %286 = vmatpush1.msra.mxu0 0.0
        %287 = vmatprep.subr.mxu0 0.0
        %288 = vmatpush1.msra.mxu0 0.0
        %289 = vmatprep.subr.mxu0 0.0
        %290 = vmatpush1.msra.mxu0 0.0
        %291 = vmatprep.subr.mxu0 0.0
        %292 = vmatpush1.msra.mxu0 0.0
        %293 = vmatprep.subr.mxu0 0.0
        %294 = vmatpush1.msra.mxu0 0.0
        %295 = vmatprep.subr.mxu0 0.0
        %296 = vmatpush1.msra.mxu0 0.0
        %297 = vmatprep.subr.mxu0 0.0
        %298 = vmatpush1.msra.mxu0 0.0
        %299 = vmatprep.subr.mxu0 0.0
        %300 = vmatpush1.msra.mxu0 0.0
        %301 = vmatprep.subr.mxu0 0.0
        %302 = vmatpush1.msra.mxu0 0.0
        %303 = vmatprep.subr.mxu0 0.0
        %304 = vmatpush1.msra.mxu0 0.0
        %305 = vmatprep.subr.mxu0 0.0
        %306 = vmatpush1.msra.mxu0 0.0
        %307 = vmatprep.subr.mxu0 0.0
        %308 = vmatpush1.msra.mxu0 0.0
        %309 = vmatprep.subr.mxu0 0.0
        %310 = vmatpush1.msra.mxu0 0.0
        %311 = vmatprep.subr.mxu0 0.0
        %312 = vmatpush1.msra.mxu0 0.0
        %313 = vmatprep.subr.mxu0 0.0
        %314 = vmatpush1.msra.mxu0 %v188
        %315 = vmatprep.subr.mxu0 0.0
        %316 = vmatpush2.msra.mxu0 0.0
        %317 = vmatprep.subr.mxu0 0.0
        %318 = vmatpush2.msra.mxu0 0.0
        %319 = vmatprep.subr.mxu0 0.0
        %320 = vmatpush2.msra.mxu0 0.0
        %321 = vmatprep.subr.mxu0 0.0
        %322 = vmatpush2.msra.mxu0 0.0
        %323 = vmatprep.subr.mxu0 0.0
        %324 = vmatpush2.msra.mxu0 0.0
        %325 = vmatprep.subr.mxu0 0.0
        %326 = vmatpush2.msra.mxu0 0.0
        %327 = vmatprep.subr.mxu0 0.0
        %328 = vmatpush2.msra.mxu0 0.0
        %329 = vmatprep.subr.mxu0 0.0
        %330 = vmatpush2.msra.mxu0 0.0
        %331 = vmatprep.subr.mxu0 0.0
        %332 = vmatpush2.msra.mxu0 0.0
        %333 = vmatprep.subr.mxu0 0.0
        %334 = vmatpush2.msra.mxu0 0.0
        %335 = vmatprep.subr.mxu0 0.0
        %336 = vmatpush2.msra.mxu0 0.0
        %337 = vmatprep.subr.mxu0 0.0
        %338 = vmatpush2.msra.mxu0 0.0
        %339 = vmatprep.subr.mxu0 0.0
        %340 = vmatpush2.msra.mxu0 0.0
        %341 = vmatprep.subr.mxu0 0.0
        %342 = vmatpush2.msra.mxu0 0.0
        %343 = vmatprep.subr.mxu0 0.0
        %344 = vmatpush2.msra.mxu0 0.0
        %345 = vmatprep.subr.mxu0 0.0
        %346 = vmatpush2.msra.mxu0 0.0
        %347 = vmatprep.mubr.f32.mxu0 0.0
        %348 = vmatmul.mubr.f32.gmra.mxu0 %v278
        %v349 = vpop.f32.mrf.mxu0
        %v350 = vadd.f32 %v269, %v349
        %v351 = vpop.f32.mrf.mxu0
        %352 = vmatprep.mubr.f32.mxu0 0.0
        %353 = vmatmul.mubr.f32.gmra.mxu0 %v281
        %v354 = vpop.f32.mrf.mxu0
        %v355 = vadd.f32 %v274, %v354
        %v356 = vpop.f32.mrf.mxu0
        %357 = vdwg.mxu0
        %s358 = sadd.s32 %s184, 2
        %s359 = scalar_lea.vmem %s182, %s358
        %v360 = vld [vmem:[%s359] sm:$0xff]
        %v361 = vld [vmem:[%s359 + $0x8] sm:$0xff]
        %s362 = scalar_lea.vmem %s1, 16
        %v363 = vld [vmem:[%s362] sm:$0xff]
        %v365 = vsel %vm195, %v360, 0
        %v368 = vsel %vm195, %v361, 0
        %370 = vmatprep.subr.mxu0 0.0
        %371 = vmatpush1.msra.mxu0 0.0
        %372 = vmatprep.subr.mxu0 0.0
        %373 = vmatpush1.msra.mxu0 0.0
        %374 = vmatprep.subr.mxu0 0.0
        %375 = vmatpush1.msra.mxu0 0.0
        %376 = vmatprep.subr.mxu0 0.0
        %377 = vmatpush1.msra.mxu0 0.0
        %378 = vmatprep.subr.mxu0 0.0
        %379 = vmatpush1.msra.mxu0 0.0
        %380 = vmatprep.subr.mxu0 0.0
        %381 = vmatpush1.msra.mxu0 0.0
        %382 = vmatprep.subr.mxu0 0.0
        %383 = vmatpush1.msra.mxu0 0.0
        %384 = vmatprep.subr.mxu0 0.0
        %385 = vmatpush1.msra.mxu0 0.0
        %386 = vmatprep.subr.mxu0 0.0
        %387 = vmatpush1.msra.mxu0 0.0
        %388 = vmatprep.subr.mxu0 0.0
        %389 = vmatpush1.msra.mxu0 0.0
        %390 = vmatprep.subr.mxu0 0.0
        %391 = vmatpush1.msra.mxu0 0.0
        %392 = vmatprep.subr.mxu0 0.0
        %393 = vmatpush1.msra.mxu0 0.0
        %394 = vmatprep.subr.mxu0 0.0
        %395 = vmatpush1.msra.mxu0 0.0
        %396 = vmatprep.subr.mxu0 0.0
        %397 = vmatpush1.msra.mxu0 0.0
        %398 = vmatprep.subr.mxu0 0.0
        %399 = vmatpush1.msra.mxu0 0.0
        %400 = vmatprep.subr.mxu0 0.0
        %401 = vmatpush1.msra.mxu0 %v363
        %402 = vmatprep.subr.mxu0 0.0
        %403 = vmatpush2.msra.mxu0 0.0
        %404 = vmatprep.subr.mxu0 0.0
        %405 = vmatpush2.msra.mxu0 0.0
        %406 = vmatprep.subr.mxu0 0.0
        %407 = vmatpush2.msra.mxu0 0.0
        %408 = vmatprep.subr.mxu0 0.0
        %409 = vmatpush2.msra.mxu0 0.0
        %410 = vmatprep.subr.mxu0 0.0
        %411 = vmatpush2.msra.mxu0 0.0
        %412 = vmatprep.subr.mxu0 0.0
        %413 = vmatpush2.msra.mxu0 0.0
        %414 = vmatprep.subr.mxu0 0.0
        %415 = vmatpush2.msra.mxu0 0.0
        %416 = vmatprep.subr.mxu0 0.0
        %417 = vmatpush2.msra.mxu0 0.0
        %418 = vmatprep.subr.mxu0 0.0
        %419 = vmatpush2.msra.mxu0 0.0
        %420 = vmatprep.subr.mxu0 0.0
        %421 = vmatpush2.msra.mxu0 0.0
        %422 = vmatprep.subr.mxu0 0.0
        %423 = vmatpush2.msra.mxu0 0.0
        %424 = vmatprep.subr.mxu0 0.0
        %425 = vmatpush2.msra.mxu0 0.0
        %426 = vmatprep.subr.mxu0 0.0
        %427 = vmatpush2.msra.mxu0 0.0
        %428 = vmatprep.subr.mxu0 0.0
        %429 = vmatpush2.msra.mxu0 0.0
        %430 = vmatprep.subr.mxu0 0.0
        %431 = vmatpush2.msra.mxu0 0.0
        %432 = vmatprep.subr.mxu0 0.0
        %433 = vmatpush2.msra.mxu0 0.0
        %434 = vmatprep.mubr.f32.mxu0 0.0
        %435 = vmatmul.mubr.f32.gmra.mxu0 %v365
        %v436 = vpop.f32.mrf.mxu0
        %v437 = vadd.f32 0.0, %v436
        %v438 = vpop.f32.mrf.mxu0
        %439 = vmatprep.mubr.f32.mxu0 0.0
        %440 = vmatmul.mubr.f32.gmra.mxu0 %v368
        %v441 = vpop.f32.mrf.mxu0
        %v442 = vadd.f32 0.0, %v441
        %v443 = vpop.f32.mrf.mxu0
        %444 = vdwg.mxu0
        %v445 = vadd.f32 %v350, %v437
        %v446 = vadd.f32 %v355, %v442
        %v447 = vld [vmem:[%s2] sm:$0x1]
        %v449 = vlaneseq
        %v450 = vshrl.u32 %v449, 7
        %v451 = vsub.s32 0, %v450
        %v452 = vrot.slane %v447, %v451
        %v454 = vadd.f32 %v445, %v452
        %v455 = vadd.f32 %v446, %v452
        %456 = vst [vmem:[%s177] sm:$0xff] %v454
        %457 = vst [vmem:[%s177 + $0x8] sm:$0xff] %v455
        %s458 = sand.u32 %s107, 1
        %s459 = scalar_lea.sflag [#allocation3], %s458
        %s460 = sand.u32 %s107, 1
        %s461 = smul.addr %s460, 16
        %s462 = scalar_lea.vmem [#allocation2], %s461
        // Predicated region
        $region33: #{tpu_custom_call.1} parent=31 // pred_check
          %p463 = pneg %p117
        $region34: #{tpu_custom_call.1} parent=31 // pred_check_branch
          %465 = sbr.rel (%p463) target = $region36
        $region35: #{tpu_custom_call.1} parent=31 // pred_region
          %s466 = smul.u32 2, %s22
          %s468 = ssub.s32 256, 256
          %469 = vsyncadd %s459, %s468
          %s470 = smul.addr %s21, 2
          %s471 = sadd.s32 %s466, %s470
          %s472 = smul.addr %s471, 128
          %s473 = scalar_lea.hbm %s3, %s472
          %s474 = sshll.u32 %s462, 4
          %s475 = int_to_ptr.vmem [resolvable:$true] %s474
          %480 = dma.vmem_to_hbm [thread:$0]  %s475, 256, %s473, %s459, 128, 128, 8
        $region36: #{tpu_custom_call.1} parent=31 // pred_fallthru
          _
      $region32: #{tpu_custom_call.1} parent=5 // pred_fallthru
        _
      %p481 = scmp.le.s32.totalorder 2, %s12
      // Predicated region
      $region37: #{tpu_custom_call.1} parent=5 // pred_check
        %p482 = pneg %p481
      $region38: #{tpu_custom_call.1} parent=5 // pred_check_branch
        %484 = sbr.rel (%p482) target = $region40
      $region39: #{tpu_custom_call.1} parent=5 // pred_region
        %s485 = ssub.s32 %s12, 2
        // Predicated region
        $region41: #{tpu_custom_call.1} parent=39 // pred_check
          %p486 = pneg %p123
        $region42: #{tpu_custom_call.1} parent=39 // pred_check_branch
          %488 = sbr.rel (%p486) target = $region44
        $region43: #{tpu_custom_call.1} parent=39 // pred_region
          %s489 = sand.u32 %s108, 1
          %s490 = scalar_lea.sflag [#allocation3], %s489
          %s491 = sand.u32 %s108, 1
          %s492 = smul.addr %s491, 16
          %s493 = scalar_lea.vmem [#allocation2], %s492
          %494 = dma.done %s490, 256
        $region44: #{tpu_custom_call.1} parent=39 // pred_fallthru
          _
      $region40: #{tpu_custom_call.1} parent=5 // pred_fallthru
        _
    $region6: #{tpu_custom_call.1} parent=1 // loop_footer
      %s16 = sadd.s32 1, %s12
    $region7: #{tpu_custom_call.1} parent=1 // loop_footer_branch
      %11 = sbr.rel target = $region3
    $region8: #{tpu_custom_call.1} parent=1 // loop_exit
      _
    %495 = vsyncpa [#allocation3], 1
    %s496 = scalar_lea.sflag [#allocation3], 1
    %497 = vsyncpa %s496, 1

</llo_original>
